<compile_context>
chip_gen: v5e
topology: v5e:2x2
jax: 0.10.0
libtpu: 0.0.40
codegen_flags: <defaults>
</compile_context>

<pallas_src>
import functools

import numpy as np
import jax
import jax.numpy as jnp
from jax import lax
from jax.experimental import pallas as pl
from jax.experimental.pallas import tpu as pltpu


def _nearest_indices(out_size, in_size):
    # PyTorch nn.Upsample(mode='nearest', size=...): src = floor(dst * in/out), clamped.
    idx = np.floor(np.arange(out_size) * (in_size / out_size)).astype(np.int64)
    return np.minimum(idx, in_size - 1)


@functools.lru_cache(maxsize=None)
def _w_select_t(w, s_w):
    # (W, S_w): column s is one-hot at source column iw[s]. Exact 0.0/1.0 values.
    iw = _nearest_indices(s_w, w)
    m = np.zeros((w, s_w), np.float32)
    m[iw, np.arange(s_w)] = 1.0
    return jnp.asarray(m)


@functools.lru_cache(maxsize=None)
def _h_select(h, s_h):
    # (S_h, H): row i is one-hot at source row ih[i]. Only used when S_h % H != 0.
    ih = _nearest_indices(s_h, h)
    m = np.zeros((s_h, h), np.float32)
    m[np.arange(s_h), ih] = 1.0
    return jnp.asarray(m)


def _dsv_repeat_kernel(x_ref, uwt_ref, w_ref, b_ref, o_ref, *, cin, cout, h, s_w, rep_h):
    """Integer H-ratio path.

    x_ref:(1, Cin*H, W) VMEM   uwt_ref:(W, S_w) VMEM
    w_ref:(Cout, Cin) SMEM     b_ref:(Cout,) SMEM
    o_ref:(1, Cout, H, rep_h*S_w) VMEM
    """
    # Nearest upsample along W == one-hot gather matmul; HIGHEST keeps it a bit-exact copy.
    xw = jnp.dot(x_ref[0], uwt_ref[...],
                 precision=lax.Precision.HIGHEST,
                 preferred_element_type=jnp.float32)                    # (Cin*H, S_w)
    for o in range(cout):
        # 1x1 conv as VPU scalar*vector FMAs (Cin/Cout tiny -> MXU dot would be pure latency).
        conv = w_ref[o, 0] * xw[0:h, :]
        for c in range(1, cin):
            conv = conv + w_ref[o, c] * xw[c * h:(c + 1) * h, :]
        conv = (conv + b_ref[o]).astype(o_ref.dtype)                    # (H, S_w)
        # Nearest upsample along H (integer ratio): output viewed as (..., H, rep_h, S_w),
        # so each row block is simply written rep_h times at static lane offsets.
        for a in range(rep_h):
            o_ref[0, o, :, a * s_w:(a + 1) * s_w] = conv


def _dsv_general_kernel(x_ref, uwt_ref, uht_ref, w_ref, b_ref, o_ref, *, cin, cout, h, s_w):
    """General nearest-size path (non-integer H ratio): H gather via one-hot left matmul."""
    xw = jnp.dot(x_ref[0], uwt_ref[...],
                 precision=lax.Precision.HIGHEST,
                 preferred_element_type=jnp.float32)                    # (Cin*H, S_w)
    for o in range(cout):
        conv = w_ref[o, 0] * xw[0:h, :]
        for c in range(1, cin):
            conv = conv + w_ref[o, c] * xw[c * h:(c + 1) * h, :]
        conv = conv + b_ref[o]                                          # (H, S_w)
        up = jnp.dot(uht_ref[...], conv,
                     precision=lax.Precision.HIGHEST,
                     preferred_element_type=jnp.float32)                # (S_h, S_w)
        o_ref[0, o] = up.astype(o_ref.dtype)


@functools.partial(jax.jit, static_argnames=("scale_factor",))
def unet_dsv3_forward(x_nchw, weight, bias, scale_factor):
    """x_nchw: (B, Cin, H, W); weight: (Cout, Cin, 1, 1); bias: (Cout,)."""
    B, Cin, H, W = x_nchw.shape
    Cout = weight.shape[0]
    if isinstance(scale_factor, (tuple, list)):
        S_h, S_w = int(scale_factor[0]), int(scale_factor[1])
    else:
        S_h = S_w = int(scale_factor)

    out_dtype = x_nchw.dtype
    x3 = x_nchw.reshape(B, Cin * H, W)                 # pure reshape, channels-first kept
    w2 = weight.reshape(Cout, Cin).astype(jnp.float32)
    b1 = bias.astype(jnp.float32)
    uwt = _w_select_t(W, S_w)                          # (W, S_w) f32, ~W*S_w*4 bytes

    flops = 2 * B * (Cin * H) * W * S_w + 2 * B * Cout * Cin * H * S_w
    bytes_accessed = (x3.size * x3.dtype.itemsize + uwt.size * 4 + w2.size * 4 + b1.size * 4
                      + B * Cout * S_h * S_w * jnp.dtype(out_dtype).itemsize)

    common_in_specs = [
        pl.BlockSpec((1, Cin * H, W), lambda b: (b, 0, 0)),
        pl.BlockSpec((W, S_w), lambda b: (0, 0)),
    ]
    smem_specs = [
        pl.BlockSpec((Cout, Cin), lambda b: (0, 0), memory_space=pltpu.MemorySpace.SMEM),
        pl.BlockSpec((Cout,), lambda b: (0,), memory_space=pltpu.MemorySpace.SMEM),
    ]
    cparams = pltpu.CompilerParams(dimension_semantics=("parallel",))
    cost = pl.CostEstimate(flops=flops, transcendentals=0, bytes_accessed=bytes_accessed)

    if S_h % H == 0:
        rep_h = S_h // H
        kern = functools.partial(_dsv_repeat_kernel, cin=Cin, cout=Cout, h=H,
                                 s_w=S_w, rep_h=rep_h)
        out = pl.pallas_call(
            kern,
            out_shape=jax.ShapeDtypeStruct((B, Cout, H, rep_h * S_w), out_dtype),
            grid=(B,),
            in_specs=common_in_specs + smem_specs,
            out_specs=pl.BlockSpec((1, Cout, H, rep_h * S_w), lambda b: (b, 0, 0, 0)),
            compiler_params=cparams,
            cost_estimate=cost,
        )(x3, uwt, w2, b1)
    else:
        uht = _h_select(H, S_h)                        # (S_h, H) f32
        kern = functools.partial(_dsv_general_kernel, cin=Cin, cout=Cout, h=H, s_w=S_w)
        out = pl.pallas_call(
            kern,
            out_shape=jax.ShapeDtypeStruct((B, Cout, S_h, S_w), out_dtype),
            grid=(B,),
            in_specs=common_in_specs + [pl.BlockSpec((S_h, H), lambda b: (0, 0))] + smem_specs,
            out_specs=pl.BlockSpec((1, Cout, S_h, S_w), lambda b: (b, 0, 0, 0)),
            compiler_params=cparams,
            cost_estimate=cost,
        )(x3, uwt, uht, w2, b1)

    # Pure reshape back to NCHW (B, Cout, S_h, S_w).
    return out.reshape(B, Cout, S_h, S_w)


if __name__ == "__main__":
    key = jax.random.PRNGKey(0)
    k1, k2, k3 = jax.random.split(key, 3)

    # Module config: UnetDsv3(in_channels=4, out_channels=4, scale_factor=32)
    B, Cin, H, W = 2, 4, 16, 16
    Cout, scale = 4, 32

    x = jax.random.normal(k1, (B, Cin, H, W), jnp.float32)
    # Deterministic, Conv2d-like init: U(-1/sqrt(fan_in), 1/sqrt(fan_in))
    bound = 1.0 / np.sqrt(Cin * 1 * 1)
    weight = jax.random.uniform(k2, (Cout, Cin, 1, 1), jnp.float32, -bound, bound)
    bias = jax.random.uniform(k3, (Cout,), jnp.float32, -bound, bound)

    out = unet_dsv3_forward(x, weight, bias, scale_factor=scale)
    out = jax.block_until_ready(out)
    assert out.shape == (B, Cout, scale, scale), out.shape

    # Pure-JAX reference (1x1 conv + PyTorch-style nearest upsample).
    conv_ref = jnp.einsum('bihw,oi->bohw', x, weight.reshape(Cout, Cin),
                          precision='highest') + bias[None, :, None, None]
    ih = _nearest_indices(scale, H)
    iw = _nearest_indices(scale, W)
    ref = conv_ref[:, :, ih, :][:, :, :, iw]
    np.testing.assert_allclose(np.asarray(out), np.asarray(ref), rtol=1e-5, atol=1e-5)

    print("KERNEL_OK")
</pallas_src>

<mosaic_0001>
module attributes {stable_mosaic.version = 11 : i64} {
  func.func @_dsv_repeat_kernel(%arg0: i32, %arg1: memref<1x64x16xf32, #tpu.memory_space<vmem>>, %arg2: memref<16x32xf32, #tpu.memory_space<vmem>>, %arg3: memref<4x4xf32, #tpu.memory_space<smem>>, %arg4: memref<4xf32, #tpu.memory_space<smem>>, %arg5: memref<1x4x16x64xf32, #tpu.memory_space<vmem>>) attributes {dimension_semantics = [#tpu.dimension_semantics<parallel>], iteration_bounds = array<i64: 2>, scalar_prefetch = 0 : i64, scratch_operands = 0 : i64, tpu.core_type = #tpu.core_type<tc>, window_params = [{transform_indices = @transform_0, window_bounds = array<i64: 1, 64, 16>}, {pipeline_mode = #tpu.pipeline_mode<synchronous>, transform_indices = @transform_1, window_bounds = array<i64: 16, 32>}, {transform_indices = @transform_2, window_bounds = array<i64: 4, 4>}, {transform_indices = @transform_3, window_bounds = array<i64: 4>}, {transform_indices = @transform_4, window_bounds = array<i64: 1, 4, 16, 64>}]} {
    %c0 = arith.constant 0 : index
    %c0_0 = arith.constant 0 : index
    %c0_1 = arith.constant 0 : index
    %0 = vector.load %arg1[%c0, %c0_0, %c0_1] : memref<1x64x16xf32, #tpu.memory_space<vmem>>, vector<1x64x16xf32>
    %1 = vector.shape_cast %0 : vector<1x64x16xf32> to vector<64x16xf32>
    %c0_2 = arith.constant 0 : index
    %c0_3 = arith.constant 0 : index
    %2 = vector.load %arg2[%c0_2, %c0_3] : memref<16x32xf32, #tpu.memory_space<vmem>>, vector<16x32xf32>
    %cst = arith.constant dense<0.000000e+00> : vector<64x32xf32>
    %3 = tpu.matmul %1, %2, %cst {dimension_numbers = #tpu.dot_dimension_numbers<[1], [0], [0], [1], [0, 0, 1, 1], [], []>, precision = #tpu.contract_precision<fp32>} : vector<64x16xf32>, vector<16x32xf32>, vector<64x32xf32> -> vector<64x32xf32>
    %c0_4 = arith.constant 0 : index
    %c0_5 = arith.constant 0 : index
    %4 = memref.load %arg3[%c0_4, %c0_5] : memref<4x4xf32, #tpu.memory_space<smem>>
    %5 = vector.extract_strided_slice %3 {offsets = [0, 0], sizes = [16, 32], strides = [1, 1]} : vector<64x32xf32> to vector<16x32xf32>
    %6 = vector.broadcast %4 : f32 to vector<16x32xf32>
    %7 = arith.mulf %6, %5 : vector<16x32xf32>
    %c0_6 = arith.constant 0 : index
    %c1 = arith.constant 1 : index
    %8 = memref.load %arg3[%c0_6, %c1] : memref<4x4xf32, #tpu.memory_space<smem>>
    %9 = vector.extract_strided_slice %3 {offsets = [16, 0], sizes = [16, 32], strides = [1, 1]} : vector<64x32xf32> to vector<16x32xf32>
    %10 = vector.broadcast %8 : f32 to vector<16x32xf32>
    %11 = arith.mulf %10, %9 : vector<16x32xf32>
    %12 = arith.addf %7, %11 : vector<16x32xf32>
    %c0_7 = arith.constant 0 : index
    %c2 = arith.constant 2 : index
    %13 = memref.load %arg3[%c0_7, %c2] : memref<4x4xf32, #tpu.memory_space<smem>>
    %14 = vector.extract_strided_slice %3 {offsets = [32, 0], sizes = [16, 32], strides = [1, 1]} : vector<64x32xf32> to vector<16x32xf32>
    %15 = vector.broadcast %13 : f32 to vector<16x32xf32>
    %16 = arith.mulf %15, %14 : vector<16x32xf32>
    %17 = arith.addf %12, %16 : vector<16x32xf32>
    %c0_8 = arith.constant 0 : index
    %c3 = arith.constant 3 : index
    %18 = memref.load %arg3[%c0_8, %c3] : memref<4x4xf32, #tpu.memory_space<smem>>
    %19 = vector.extract_strided_slice %3 {offsets = [48, 0], sizes = [16, 32], strides = [1, 1]} : vector<64x32xf32> to vector<16x32xf32>
    %20 = vector.broadcast %18 : f32 to vector<16x32xf32>
    %21 = arith.mulf %20, %19 : vector<16x32xf32>
    %22 = arith.addf %17, %21 : vector<16x32xf32>
    %c0_9 = arith.constant 0 : index
    %23 = memref.load %arg4[%c0_9] : memref<4xf32, #tpu.memory_space<smem>>
    %24 = vector.broadcast %23 : f32 to vector<16x32xf32>
    %25 = arith.addf %22, %24 : vector<16x32xf32>
    %c0_10 = arith.constant 0 : index
    %c0_11 = arith.constant 0 : index
    %c0_12 = arith.constant 0 : index
    %c0_13 = arith.constant 0 : index
    %26 = vector.load %arg5[%c0_10, %c0_11, %c0_12, %c0_13] : memref<1x4x16x64xf32, #tpu.memory_space<vmem>>, vector<1x1x16x32xf32>
    %27 = vector.shape_cast %26 : vector<1x1x16x32xf32> to vector<16x32xf32>
    %28 = vector.shape_cast %25 : vector<16x32xf32> to vector<1x1x16x32xf32>
    tpu.vector_store %arg5[%c0_10, %c0_11, %c0_12, %c0_13], %28 {strides = array<i32>} : memref<1x4x16x64xf32, #tpu.memory_space<vmem>>, vector<1x1x16x32xf32>,
    %c0_14 = arith.constant 0 : index
    %c0_15 = arith.constant 0 : index
    %c0_16 = arith.constant 0 : index
    %c32 = arith.constant 32 : index
    %29 = vector.load %arg5[%c0_14, %c0_15, %c0_16, %c32] : memref<1x4x16x64xf32, #tpu.memory_space<vmem>>, vector<1x1x16x32xf32>
    %30 = vector.shape_cast %29 : vector<1x1x16x32xf32> to vector<16x32xf32>
    %31 = vector.shape_cast %25 : vector<16x32xf32> to vector<1x1x16x32xf32>
    tpu.vector_store %arg5[%c0_14, %c0_15, %c0_16, %c32], %31 {strides = array<i32>} : memref<1x4x16x64xf32, #tpu.memory_space<vmem>>, vector<1x1x16x32xf32>,
    %c1_17 = arith.constant 1 : index
    %c0_18 = arith.constant 0 : index
    %32 = memref.load %arg3[%c1_17, %c0_18] : memref<4x4xf32, #tpu.memory_space<smem>>
    %33 = vector.extract_strided_slice %3 {offsets = [0, 0], sizes = [16, 32], strides = [1, 1]} : vector<64x32xf32> to vector<16x32xf32>
    %34 = vector.broadcast %32 : f32 to vector<16x32xf32>
    %35 = arith.mulf %34, %33 : vector<16x32xf32>
    %c1_19 = arith.constant 1 : index
    %c1_20 = arith.constant 1 : index
    %36 = memref.load %arg3[%c1_19, %c1_20] : memref<4x4xf32, #tpu.memory_space<smem>>
    %37 = vector.extract_strided_slice %3 {offsets = [16, 0], sizes = [16, 32], strides = [1, 1]} : vector<64x32xf32> to vector<16x32xf32>
    %38 = vector.broadcast %36 : f32 to vector<16x32xf32>
    %39 = arith.mulf %38, %37 : vector<16x32xf32>
    %40 = arith.addf %35, %39 : vector<16x32xf32>
    %c1_21 = arith.constant 1 : index
    %c2_22 = arith.constant 2 : index
    %41 = memref.load %arg3[%c1_21, %c2_22] : memref<4x4xf32, #tpu.memory_space<smem>>
    %42 = vector.extract_strided_slice %3 {offsets = [32, 0], sizes = [16, 32], strides = [1, 1]} : vector<64x32xf32> to vector<16x32xf32>
    %43 = vector.broadcast %41 : f32 to vector<16x32xf32>
    %44 = arith.mulf %43, %42 : vector<16x32xf32>
    %45 = arith.addf %40, %44 : vector<16x32xf32>
    %c1_23 = arith.constant 1 : index
    %c3_24 = arith.constant 3 : index
    %46 = memref.load %arg3[%c1_23, %c3_24] : memref<4x4xf32, #tpu.memory_space<smem>>
    %47 = vector.extract_strided_slice %3 {offsets = [48, 0], sizes = [16, 32], strides = [1, 1]} : vector<64x32xf32> to vector<16x32xf32>
    %48 = vector.broadcast %46 : f32 to vector<16x32xf32>
    %49 = arith.mulf %48, %47 : vector<16x32xf32>
    %50 = arith.addf %45, %49 : vector<16x32xf32>
    %c1_25 = arith.constant 1 : index
    %51 = memref.load %arg4[%c1_25] : memref<4xf32, #tpu.memory_space<smem>>
    %52 = vector.broadcast %51 : f32 to vector<16x32xf32>
    %53 = arith.addf %50, %52 : vector<16x32xf32>
    %c0_26 = arith.constant 0 : index
    %c1_27 = arith.constant 1 : index
    %c0_28 = arith.constant 0 : index
    %c0_29 = arith.constant 0 : index
    %54 = vector.load %arg5[%c0_26, %c1_27, %c0_28, %c0_29] : memref<1x4x16x64xf32, #tpu.memory_space<vmem>>, vector<1x1x16x32xf32>
    %55 = vector.shape_cast %54 : vector<1x1x16x32xf32> to vector<16x32xf32>
    %56 = vector.shape_cast %53 : vector<16x32xf32> to vector<1x1x16x32xf32>
    tpu.vector_store %arg5[%c0_26, %c1_27, %c0_28, %c0_29], %56 {strides = array<i32>} : memref<1x4x16x64xf32, #tpu.memory_space<vmem>>, vector<1x1x16x32xf32>,
    %c0_30 = arith.constant 0 : index
    %c1_31 = arith.constant 1 : index
    %c0_32 = arith.constant 0 : index
    %c32_33 = arith.constant 32 : index
    %57 = vector.load %arg5[%c0_30, %c1_31, %c0_32, %c32_33] : memref<1x4x16x64xf32, #tpu.memory_space<vmem>>, vector<1x1x16x32xf32>
    %58 = vector.shape_cast %57 : vector<1x1x16x32xf32> to vector<16x32xf32>
    %59 = vector.shape_cast %53 : vector<16x32xf32> to vector<1x1x16x32xf32>
    tpu.vector_store %arg5[%c0_30, %c1_31, %c0_32, %c32_33], %59 {strides = array<i32>} : memref<1x4x16x64xf32, #tpu.memory_space<vmem>>, vector<1x1x16x32xf32>,
    %c2_34 = arith.constant 2 : index
    %c0_35 = arith.constant 0 : index
    %60 = memref.load %arg3[%c2_34, %c0_35] : memref<4x4xf32, #tpu.memory_space<smem>>
    %61 = vector.extract_strided_slice %3 {offsets = [0, 0], sizes = [16, 32], strides = [1, 1]} : vector<64x32xf32> to vector<16x32xf32>
    %62 = vector.broadcast %60 : f32 to vector<16x32xf32>
    %63 = arith.mulf %62, %61 : vector<16x32xf32>
    %c2_36 = arith.constant 2 : index
    %c1_37 = arith.constant 1 : index
    %64 = memref.load %arg3[%c2_36, %c1_37] : memref<4x4xf32, #tpu.memory_space<smem>>
    %65 = vector.extract_strided_slice %3 {offsets = [16, 0], sizes = [16, 32], strides = [1, 1]} : vector<64x32xf32> to vector<16x32xf32>
    %66 = vector.broadcast %64 : f32 to vector<16x32xf32>
    %67 = arith.mulf %66, %65 : vector<16x32xf32>
    %68 = arith.addf %63, %67 : vector<16x32xf32>
    %c2_38 = arith.constant 2 : index
    %c2_39 = arith.constant 2 : index
    %69 = memref.load %arg3[%c2_38, %c2_39] : memref<4x4xf32, #tpu.memory_space<smem>>
    %70 = vector.extract_strided_slice %3 {offsets = [32, 0], sizes = [16, 32], strides = [1, 1]} : vector<64x32xf32> to vector<16x32xf32>
    %71 = vector.broadcast %69 : f32 to vector<16x32xf32>
    %72 = arith.mulf %71, %70 : vector<16x32xf32>
    %73 = arith.addf %68, %72 : vector<16x32xf32>
    %c2_40 = arith.constant 2 : index
    %c3_41 = arith.constant 3 : index
    %74 = memref.load %arg3[%c2_40, %c3_41] : memref<4x4xf32, #tpu.memory_space<smem>>
    %75 = vector.extract_strided_slice %3 {offsets = [48, 0], sizes = [16, 32], strides = [1, 1]} : vector<64x32xf32> to vector<16x32xf32>
    %76 = vector.broadcast %74 : f32 to vector<16x32xf32>
    %77 = arith.mulf %76, %75 : vector<16x32xf32>
    %78 = arith.addf %73, %77 : vector<16x32xf32>
    %c2_42 = arith.constant 2 : index
    %79 = memref.load %arg4[%c2_42] : memref<4xf32, #tpu.memory_space<smem>>
    %80 = vector.broadcast %79 : f32 to vector<16x32xf32>
    %81 = arith.addf %78, %80 : vector<16x32xf32>
    %c0_43 = arith.constant 0 : index
    %c2_44 = arith.constant 2 : index
    %c0_45 = arith.constant 0 : index
    %c0_46 = arith.constant 0 : index
    %82 = vector.load %arg5[%c0_43, %c2_44, %c0_45, %c0_46] : memref<1x4x16x64xf32, #tpu.memory_space<vmem>>, vector<1x1x16x32xf32>
    %83 = vector.shape_cast %82 : vector<1x1x16x32xf32> to vector<16x32xf32>
    %84 = vector.shape_cast %81 : vector<16x32xf32> to vector<1x1x16x32xf32>
    tpu.vector_store %arg5[%c0_43, %c2_44, %c0_45, %c0_46], %84 {strides = array<i32>} : memref<1x4x16x64xf32, #tpu.memory_space<vmem>>, vector<1x1x16x32xf32>,
    %c0_47 = arith.constant 0 : index
    %c2_48 = arith.constant 2 : index
    %c0_49 = arith.constant 0 : index
    %c32_50 = arith.constant 32 : index
    %85 = vector.load %arg5[%c0_47, %c2_48, %c0_49, %c32_50] : memref<1x4x16x64xf32, #tpu.memory_space<vmem>>, vector<1x1x16x32xf32>
    %86 = vector.shape_cast %85 : vector<1x1x16x32xf32> to vector<16x32xf32>
    %87 = vector.shape_cast %81 : vector<16x32xf32> to vector<1x1x16x32xf32>
    tpu.vector_store %arg5[%c0_47, %c2_48, %c0_49, %c32_50], %87 {strides = array<i32>} : memref<1x4x16x64xf32, #tpu.memory_space<vmem>>, vector<1x1x16x32xf32>,
    %c3_51 = arith.constant 3 : index
    %c0_52 = arith.constant 0 : index
    %88 = memref.load %arg3[%c3_51, %c0_52] : memref<4x4xf32, #tpu.memory_space<smem>>
    %89 = vector.extract_strided_slice %3 {offsets = [0, 0], sizes = [16, 32], strides = [1, 1]} : vector<64x32xf32> to vector<16x32xf32>
    %90 = vector.broadcast %88 : f32 to vector<16x32xf32>
    %91 = arith.mulf %90, %89 : vector<16x32xf32>
    %c3_53 = arith.constant 3 : index
    %c1_54 = arith.constant 1 : index
    %92 = memref.load %arg3[%c3_53, %c1_54] : memref<4x4xf32, #tpu.memory_space<smem>>
    %93 = vector.extract_strided_slice %3 {offsets = [16, 0], sizes = [16, 32], strides = [1, 1]} : vector<64x32xf32> to vector<16x32xf32>
    %94 = vector.broadcast %92 : f32 to vector<16x32xf32>
    %95 = arith.mulf %94, %93 : vector<16x32xf32>
    %96 = arith.addf %91, %95 : vector<16x32xf32>
    %c3_55 = arith.constant 3 : index
    %c2_56 = arith.constant 2 : index
    %97 = memref.load %arg3[%c3_55, %c2_56] : memref<4x4xf32, #tpu.memory_space<smem>>
    %98 = vector.extract_strided_slice %3 {offsets = [32, 0], sizes = [16, 32], strides = [1, 1]} : vector<64x32xf32> to vector<16x32xf32>
    %99 = vector.broadcast %97 : f32 to vector<16x32xf32>
    %100 = arith.mulf %99, %98 : vector<16x32xf32>
    %101 = arith.addf %96, %100 : vector<16x32xf32>
    %c3_57 = arith.constant 3 : index
    %c3_58 = arith.constant 3 : index
    %102 = memref.load %arg3[%c3_57, %c3_58] : memref<4x4xf32, #tpu.memory_space<smem>>
    %103 = vector.extract_strided_slice %3 {offsets = [48, 0], sizes = [16, 32], strides = [1, 1]} : vector<64x32xf32> to vector<16x32xf32>
    %104 = vector.broadcast %102 : f32 to vector<16x32xf32>
    %105 = arith.mulf %104, %103 : vector<16x32xf32>
    %106 = arith.addf %101, %105 : vector<16x32xf32>
    %c3_59 = arith.constant 3 : index
    %107 = memref.load %arg4[%c3_59] : memref<4xf32, #tpu.memory_space<smem>>
    %108 = vector.broadcast %107 : f32 to vector<16x32xf32>
    %109 = arith.addf %106, %108 : vector<16x32xf32>
    %c0_60 = arith.constant 0 : index
    %c3_61 = arith.constant 3 : index
    %c0_62 = arith.constant 0 : index
    %c0_63 = arith.constant 0 : index
    %110 = vector.load %arg5[%c0_60, %c3_61, %c0_62, %c0_63] : memref<1x4x16x64xf32, #tpu.memory_space<vmem>>, vector<1x1x16x32xf32>
    %111 = vector.shape_cast %110 : vector<1x1x16x32xf32> to vector<16x32xf32>
    %112 = vector.shape_cast %109 : vector<16x32xf32> to vector<1x1x16x32xf32>
    tpu.vector_store %arg5[%c0_60, %c3_61, %c0_62, %c0_63], %112 {strides = array<i32>} : memref<1x4x16x64xf32, #tpu.memory_space<vmem>>, vector<1x1x16x32xf32>,
    %c0_64 = arith.constant 0 : index
    %c3_65 = arith.constant 3 : index
    %c0_66 = arith.constant 0 : index
    %c32_67 = arith.constant 32 : index
    %113 = vector.load %arg5[%c0_64, %c3_65, %c0_66, %c32_67] : memref<1x4x16x64xf32, #tpu.memory_space<vmem>>, vector<1x1x16x32xf32>
    %114 = vector.shape_cast %113 : vector<1x1x16x32xf32> to vector<16x32xf32>
    %115 = vector.shape_cast %109 : vector<16x32xf32> to vector<1x1x16x32xf32>
    tpu.vector_store %arg5[%c0_64, %c3_65, %c0_66, %c32_67], %115 {strides = array<i32>} : memref<1x4x16x64xf32, #tpu.memory_space<vmem>>, vector<1x1x16x32xf32>,
    return
  }
  func.func @transform_0(%arg0: i32) -> (i32, i32, i32) {
    %c0_i32 = arith.constant 0 : i32
    %c0_i32_0 = arith.constant 0 : i32
    %c0_i32_1 = arith.constant 0 : i32
    return %arg0, %c0_i32, %c0_i32_0 : i32, i32, i32
  }
  func.func @transform_1(%arg0: i32) -> (i32, i32) {
    %c0_i32 = arith.constant 0 : i32
    %c0_i32_0 = arith.constant 0 : i32
    %c0_i32_1 = arith.constant 0 : i32
    return %c0_i32, %c0_i32_0 : i32, i32
  }
  func.func @transform_2(%arg0: i32) -> (i32, i32) {
    %c0_i32 = arith.constant 0 : i32
    %c0_i32_0 = arith.constant 0 : i32
    %c0_i32_1 = arith.constant 0 : i32
    return %c0_i32, %c0_i32_0 : i32, i32
  }
  func.func @transform_3(%arg0: i32) -> i32 {
    %c0_i32 = arith.constant 0 : i32
    %c0_i32_0 = arith.constant 0 : i32
    return %c0_i32 : i32
  }
  func.func @transform_4(%arg0: i32) -> (i32, i32, i32, i32) {
    %c0_i32 = arith.constant 0 : i32
    %c0_i32_0 = arith.constant 0 : i32
    %c0_i32_1 = arith.constant 0 : i32
    %c0_i32_2 = arith.constant 0 : i32
    return %arg0, %c0_i32, %c0_i32_0, %c0_i32_1 : i32, i32, i32, i32
  }
}

</mosaic_0001>

<llo_original>
// kernel: unet_dsv3_forward.1
$region0: #{unet_dsv3_forward.1}
  #allocation0 [shape = 'u32[]', space=smem, size = 0x4, offset = 0x4, fixed_abs, tag = 'smem constant byte address 0x4 - core index']
  #allocation1 [shape = 'u32[72,128]{1,0:T(1,128)}', space=vmem, size = 0x9000, scoped, tag = 'internal scratch']
  %s0 = inlined_call_operand.hbm [shape: f32[2,64,16], index: 0, kind: input, shape index: {}]
  %s1 = inlined_call_operand.hbm [shape: f32[16,32], index: 1, kind: input, shape index: {}]
  %s2 = inlined_call_operand.hbm [shape: f32[4,4], index: 2, kind: input, shape index: {}]
  %s3 = inlined_call_operand.vmem [shape: f32[4], index: 3, kind: input, shape index: {}]
  %s4 = inlined_call_operand.vmem [shape: f32[2,4,16,64], index: 4, kind: output, shape index: {}]
  %s5 = sld [smem:[#allocation0]]
  $region65: #{unet_dsv3_forward.1} parent=0
    _
  %s7 = ssub.s32 1, %s5
  %s8 = scalar_select 0, %s7, %s5
  $region1: #{unet_dsv3_forward.1} parent=0
    #allocation2 [shape = 'u8[65536]{0}', space=vmem, size = 0x10000, scoped, tag = 'input window, operand 0']
    #allocation3 [shape = 's32[2]{0}', space=sflag, size = 0x8, scoped, tag = 'scoped memory for unet_dsv3_forward.1']
    #allocation4 [shape = 's32[2]{0}', space=sflag, size = 0x8, scoped, tag = 'scoped memory for unet_dsv3_forward.1']
    #allocation5 [shape = 's32[2]{0}', space=sflag, size = 0x8, scoped, tag = 'scoped memory for unet_dsv3_forward.1']
    #allocation6 [shape = 'u8[8192]{0}', space=vmem, size = 0x2000, scoped, tag = 'input window, operand 1, single buffered']
    #allocation7 [shape = 's32[1]{0}', space=sflag, size = 0x4, scoped, tag = 'scoped memory for unet_dsv3_forward.1']
    #allocation8 [shape = 'u8[2048]{0}', space=smem, size = 0x800, scoped, tag = 'input window, operand 2, single buffered']
    #allocation9 [shape = 'u8[512]{0}', space=smem, size = 0x200, scoped, tag = 'input window, operand 3, single buffered']
    %9 = vsyncpa [#allocation3], 0
    %s10 = scalar_lea.sflag [#allocation3], 1
    %11 = vsyncpa %s10, 0
    %12 = vsyncpa [#allocation7], 0
    %13 = vsyncpa [#allocation4], 0
    %14 = vsyncpa [#allocation5], 0
    loop: start=0, step=1, limit=4
    $region2: #{unet_dsv3_forward.1} parent=1 // loop_pre_header
      _
    $region3: #{unet_dsv3_forward.1} parent=1 // loop_header
      %s16 = sphi 0, %s20
      %p17 = scmp.ge.s32.totalorder %s16, 4
      %s26 = sphi 0, %s28
      %s29 = sphi 0, %s26
      %s30 = sphi 0, %s29
      %s46 = sphi 0, %s30
      %s50 = sphi 0, %s50
      %s52 = sphi 0, %s50
      %s53 = sphi 0, %s52
      %s67 = sphi 0, %s53
      %s71 = sphi 0, %s71
      %s73 = sphi 0, %s71
      %s74 = sphi 0, %s73
      %s88 = sphi 0, %s74
      %s92 = sphi 0, %s92
      %s94 = sphi 0, %s92
      %s95 = sphi 0, %s94
      %s109 = sphi 0, %s95
      %s115 = sphi 0, %s117
      %s118 = sphi 0, %s115
      %s119 = sphi 0, %s118
      %s135 = sphi 0, %s119
    $region4: #{unet_dsv3_forward.1} parent=1 // loop_header_branch
      %19 = sbr.rel (%p17) target = $region8
    $region5: #{unet_dsv3_forward.1} parent=1 // loop_body
      %s21 = ssub.s32 %s16, 1
      %s22 = ssub.s32 %s16, 2
      %s23 = sadd.s32 %s16, 1
      %s24 = ssub.s32 %s16, %s23
      %p25 = scmp.eq.s32.totalorder %s24, 0
      %s27 = sadd.s32 %s26, 1
      %s28 = scalar_select %p25, %s26, %s27
      %p31 = pneg %p25
      %p32 = scmp.eq.s32.totalorder %s16, 1
      %p33 = por %p31, %p32
      %p34 = scmp.ne.s32.totalorder %s26, %s29
      %p35 = scmp.eq.s32.totalorder %s16, 0
      %p36 = por %p34, %p35
      %p37 = scmp.ne.s32.totalorder %s26, %s29
      %p38 = scmp.eq.s32.totalorder %s21, 1
      %p39 = por %p37, %p38
      %p40 = scmp.ne.s32.totalorder %s29, %s30
      %p41 = scmp.eq.s32.totalorder %s21, 0
      %p42 = por %p40, %p41
      %p43 = scmp.ne.s32.totalorder %s29, %s30
      %p44 = scmp.eq.s32.totalorder %s22, 1
      %p45 = por %p43, %p44
      %p47 = scmp.ne.s32.totalorder %s30, %s46
      %p48 = scmp.eq.s32.totalorder %s22, 0
      %p49 = por %p47, %p48
      %s51 = sadd.s32 %s50, 1
      %p54 = scmp.eq.s32.totalorder %s16, 1
      %p55 = scmp.ne.s32.totalorder %s50, %s52
      %p56 = scmp.eq.s32.totalorder %s16, 0
      %p57 = por %p55, %p56
      %p58 = scmp.ne.s32.totalorder %s50, %s52
      %p59 = scmp.eq.s32.totalorder %s21, 1
      %p60 = por %p58, %p59
      %p61 = scmp.ne.s32.totalorder %s52, %s53
      %p62 = scmp.eq.s32.totalorder %s21, 0
      %p63 = por %p61, %p62
      %p64 = scmp.ne.s32.totalorder %s52, %s53
      %p65 = scmp.eq.s32.totalorder %s22, 1
      %p66 = por %p64, %p65
      %p68 = scmp.ne.s32.totalorder %s53, %s67
      %p69 = scmp.eq.s32.totalorder %s22, 0
      %p70 = por %p68, %p69
      %s72 = sadd.s32 %s71, 1
      %p75 = scmp.eq.s32.totalorder %s16, 1
      %p76 = scmp.ne.s32.totalorder %s71, %s73
      %p77 = scmp.eq.s32.totalorder %s16, 0
      %p78 = por %p76, %p77
      %p79 = scmp.ne.s32.totalorder %s71, %s73
      %p80 = scmp.eq.s32.totalorder %s21, 1
      %p81 = por %p79, %p80
      %p82 = scmp.ne.s32.totalorder %s73, %s74
      %p83 = scmp.eq.s32.totalorder %s21, 0
      %p84 = por %p82, %p83
      %p85 = scmp.ne.s32.totalorder %s73, %s74
      %p86 = scmp.eq.s32.totalorder %s22, 1
      %p87 = por %p85, %p86
      %p89 = scmp.ne.s32.totalorder %s74, %s88
      %p90 = scmp.eq.s32.totalorder %s22, 0
      %p91 = por %p89, %p90
      %s93 = sadd.s32 %s92, 1
      %p96 = scmp.eq.s32.totalorder %s16, 1
      %p97 = scmp.ne.s32.totalorder %s92, %s94
      %p98 = scmp.eq.s32.totalorder %s16, 0
      %p99 = por %p97, %p98
      %p100 = scmp.ne.s32.totalorder %s92, %s94
      %p101 = scmp.eq.s32.totalorder %s21, 1
      %p102 = por %p100, %p101
      %p103 = scmp.ne.s32.totalorder %s94, %s95
      %p104 = scmp.eq.s32.totalorder %s21, 0
      %p105 = por %p103, %p104
      %p106 = scmp.ne.s32.totalorder %s94, %s95
      %p107 = scmp.eq.s32.totalorder %s22, 1
      %p108 = por %p106, %p107
      %p110 = scmp.ne.s32.totalorder %s95, %s109
      %p111 = scmp.eq.s32.totalorder %s22, 0
      %p112 = por %p110, %p111
      %s113 = ssub.s32 %s16, %s23
      %p114 = scmp.eq.s32.totalorder %s113, 0
      %s116 = sadd.s32 %s115, 1
      %s117 = scalar_select %p114, %s115, %s116
      %p120 = pneg %p114
      %p121 = scmp.eq.s32.totalorder %s16, 1
      %p122 = por %p120, %p121
      %p123 = scmp.ne.s32.totalorder %s115, %s118
      %p124 = scmp.eq.s32.totalorder %s16, 0
      %p125 = por %p123, %p124
      %p126 = scmp.ne.s32.totalorder %s115, %s118
      %p127 = scmp.eq.s32.totalorder %s21, 1
      %p128 = por %p126, %p127
      %p129 = scmp.ne.s32.totalorder %s118, %s119
      %p130 = scmp.eq.s32.totalorder %s21, 0
      %p131 = por %p129, %p130
      %p132 = scmp.ne.s32.totalorder %s118, %s119
      %p133 = scmp.eq.s32.totalorder %s22, 1
      %p134 = por %p132, %p133
      %p136 = scmp.ne.s32.totalorder %s119, %s135
      %p137 = scmp.eq.s32.totalorder %s22, 0
      %p138 = por %p136, %p137
      %p139 = scmp.le.s32.totalorder 1, %s16
      %p140 = scmp.lt.s32.totalorder %s16, 3
      %p141 = pnand %p139, %p140
      %p142 = pneg %p141
      // Predicated region
      $region9: #{unet_dsv3_forward.1} parent=5 // pred_check
        _
      $region10: #{unet_dsv3_forward.1} parent=5 // pred_check_branch
        %144 = sbr.rel (%p141) target = $region12
      $region11: #{unet_dsv3_forward.1} parent=5 // pred_region
        %s145 = ssub.s32 %s16, 1
        // Predicated region
        $region13: #{unet_dsv3_forward.1} parent=11 // pred_check
          %p146 = pneg %p63
        $region14: #{unet_dsv3_forward.1} parent=11 // pred_check_branch
          %148 = sbr.rel (%p146) target = $region16
        $region15: #{unet_dsv3_forward.1} parent=11 // pred_region
          %150 = vsyncadd [#allocation7], 0
          %s151 = sshll.u32 %s1, 4
          %s152 = int_to_ptr.hbm [resolvable:$true] %s151
          %s153 = sshll.u32 [#allocation6], 4
          %s154 = int_to_ptr.vmem [resolvable:$true] %s153
          %159 = dma.hbm_to_vmem [thread:$0]  %s152, 256, %s154, [#allocation7], 128, 128, 8
        $region16: #{unet_dsv3_forward.1} parent=11 // pred_fallthru
          _
        // Predicated region
        $region17: #{unet_dsv3_forward.1} parent=11 // pred_check
          %p160 = pneg %p84
        $region18: #{unet_dsv3_forward.1} parent=11 // pred_check_branch
          %162 = sbr.rel (%p160) target = $region20
        $region19: #{unet_dsv3_forward.1} parent=11 // pred_region
          %164 = vsyncadd [#allocation4], 0
          %s166 = sshll.u32 %s2, 4
          %s167 = int_to_ptr.hbm [resolvable:$true] %s166
          %169 = dma.hbm_to_smem %s167, 64, [#allocation8], [#allocation4]
        $region20: #{unet_dsv3_forward.1} parent=11 // pred_fallthru
          _
        // Predicated region
        $region21: #{unet_dsv3_forward.1} parent=11 // pred_check
          %p170 = pneg %p105
        $region22: #{unet_dsv3_forward.1} parent=11 // pred_check_branch
          %172 = sbr.rel (%p170) target = $region24
        $region23: #{unet_dsv3_forward.1} parent=11 // pred_region
          %174 = vsyncadd [#allocation5], 0
          %s176 = sshll.u32 %s3, 4
          %s177 = int_to_ptr.vmem [resolvable:$true] %s176
          %179 = dma.vmem_to_smem %s177, 16, [#allocation9], [#allocation5]
        $region24: #{unet_dsv3_forward.1} parent=11 // pred_fallthru
          _
      $region12: #{unet_dsv3_forward.1} parent=5 // pred_fallthru
        _
      %p180 = scmp.lt.s32.totalorder %s16, 2
      // Predicated region
      $region25: #{unet_dsv3_forward.1} parent=5 // pred_check
        %p181 = pneg %p180
      $region26: #{unet_dsv3_forward.1} parent=5 // pred_check_branch
        %183 = sbr.rel (%p181) target = $region28
      $region27: #{unet_dsv3_forward.1} parent=5 // pred_region
        // Predicated region
        $region29: #{unet_dsv3_forward.1} parent=27 // pred_check
          %p184 = pneg %p36
        $region30: #{unet_dsv3_forward.1} parent=27 // pred_check_branch
          %186 = sbr.rel (%p184) target = $region32
        $region31: #{unet_dsv3_forward.1} parent=27 // pred_region
          %s187 = sand.u32 %s26, 1
          %s188 = scalar_lea.sflag [#allocation3], %s187
          %s189 = sand.u32 %s26, 1
          %s190 = smul.addr %s189, 64
          %s191 = scalar_lea.vmem [#allocation2], %s190
          %193 = vsyncadd %s188, 0
          %s194 = smul.addr %s16, 8
          %s195 = smul.addr %s194, 8
          %s196 = scalar_lea.hbm %s0, %s195
          %s197 = sshll.u32 %s196, 4
          %s198 = int_to_ptr.hbm [resolvable:$true] %s197
          %s199 = sshll.u32 %s191, 4
          %s200 = int_to_ptr.vmem [resolvable:$true] %s199
          %205 = dma.hbm_to_vmem [thread:$0]  %s198, 1024, %s200, %s188, 128, 128, 8
        $region32: #{unet_dsv3_forward.1} parent=27 // pred_fallthru
          _
      $region28: #{unet_dsv3_forward.1} parent=5 // pred_fallthru
        _
      %p206 = scmp.le.s32.totalorder 1, %s16
      %p207 = scmp.lt.s32.totalorder %s16, 3
      %p208 = pnand %p206, %p207
      %p209 = pneg %p208
      // Predicated region
      $region33: #{unet_dsv3_forward.1} parent=5 // pred_check
        _
      $region34: #{unet_dsv3_forward.1} parent=5 // pred_check_branch
        %211 = sbr.rel (%p208) target = $region36
      $region35: #{unet_dsv3_forward.1} parent=5 // pred_region
        %s212 = ssub.s32 %s16, 1
        %s213 = sand.u32 %s29, 1
        %s214 = scalar_lea.sflag [#allocation3], %s213
        %s215 = sand.u32 %s29, 1
        %s216 = smul.addr %s215, 64
        %s217 = scalar_lea.vmem [#allocation2], %s216
        // Predicated region
        $region37: #{unet_dsv3_forward.1} parent=35 // pred_check
          %p218 = pneg %p42
        $region38: #{unet_dsv3_forward.1} parent=35 // pred_check_branch
          %220 = sbr.rel (%p218) target = $region40
        $region39: #{unet_dsv3_forward.1} parent=35 // pred_region
          %222 = dma.done %s214, 1024
        $region40: #{unet_dsv3_forward.1} parent=35 // pred_fallthru
          _
        // Predicated region
        $region41: #{unet_dsv3_forward.1} parent=35 // pred_check
          %p223 = pneg %p63
        $region42: #{unet_dsv3_forward.1} parent=35 // pred_check_branch
          %225 = sbr.rel (%p223) target = $region44
        $region43: #{unet_dsv3_forward.1} parent=35 // pred_region
          %227 = dma.done [#allocation7], 256
        $region44: #{unet_dsv3_forward.1} parent=35 // pred_fallthru
          _
        // Predicated region
        $region45: #{unet_dsv3_forward.1} parent=35 // pred_check
          %p228 = pneg %p84
        $region46: #{unet_dsv3_forward.1} parent=35 // pred_check_branch
          %230 = sbr.rel (%p228) target = $region48
        $region47: #{unet_dsv3_forward.1} parent=35 // pred_region
          %232 = dma.done [#allocation4], 64
        $region48: #{unet_dsv3_forward.1} parent=35 // pred_fallthru
          _
        // Predicated region
        $region49: #{unet_dsv3_forward.1} parent=35 // pred_check
          %p233 = pneg %p105
        $region50: #{unet_dsv3_forward.1} parent=35 // pred_check_branch
          %235 = sbr.rel (%p233) target = $region52
        $region51: #{unet_dsv3_forward.1} parent=35 // pred_region
          %237 = dma.done [#allocation5], 16
        $region52: #{unet_dsv3_forward.1} parent=35 // pred_fallthru
          _
        %238 = sfence
        %s239 = sand.u32 %s29, 1
        %s240 = scalar_lea.sflag [#allocation3], %s239
        %s241 = sand.u32 %s29, 1
        %s242 = smul.addr %s241, 64
        %s243 = scalar_lea.vmem [#allocation2], %s242
        %p244 = pneg %p42
        %p245 = pneg %p39
        %p246 = pneg %p63
        %p247 = pneg %p60
        %p248 = pneg %p84
        %p249 = pneg %p81
        %p250 = pneg %p105
        %p251 = pneg %p102
        %p252 = pneg %p131
        %p253 = pneg %p128
        %p254 = scmp.lt.s32.totalorder %s21, 1
        %s255 = scalar_select %p254, %s21, 1
        %s256 = smul.addr %s255, 8
        %s257 = smul.addr %s256, 8
        %s258 = scalar_lea.vmem %s4, %s257
        %p259 = scmp.lt.s32.totalorder %s21, 1
        %s260 = scalar_select %p259, %s21, 1
        %s261 = smul.addr %s260, 8
        %s262 = smul.addr %s261, 8
        %s263 = scalar_lea.vmem %s4, %s262
        %v264 = vld [vmem:[%s217] sm:$0xff]
        %v265 = vld [vmem:[%s217 + $0x8] sm:$0xff]
        %v266 = vld [vmem:[%s217 + $0x10] sm:$0xff]
        %v267 = vld [vmem:[%s217 + $0x18] sm:$0xff]
        %v268 = vld [vmem:[%s217 + $0x20] sm:$0xff]
        %v269 = vld [vmem:[%s217 + $0x28] sm:$0xff]
        %v270 = vld [vmem:[%s217 + $0x30] sm:$0xff]
        %v271 = vld [vmem:[%s217 + $0x38] sm:$0xff]
        %v272 = vld [vmem:[#allocation6] sm:$0xff]
        %v273 = vld [vmem:[#allocation6 + $0x8] sm:$0xff]
        %vm274 = vcmask 130048
        %v276 = vsel %vm274, %v264, 0
        %v279 = vsel %vm274, %v265, 0
        %v282 = vsel %vm274, %v266, 0
        %v285 = vsel %vm274, %v267, 0
        %v288 = vsel %vm274, %v268, 0
        %v291 = vsel %vm274, %v269, 0
        %v294 = vsel %vm274, %v270, 0
        %v297 = vsel %vm274, %v271, 0
        %299 = vmatpush.msra.mxu0 0.0
        %300 = vmatpush.msra.mxu0 0.0
        %301 = vmatpush.msra.mxu0 0.0
        %302 = vmatpush.msra.mxu0 0.0
        %303 = vmatpush.msra.mxu0 0.0
        %304 = vmatpush.msra.mxu0 0.0
        %305 = vmatpush.msra.mxu0 0.0
        %306 = vmatpush.msra.mxu0 0.0
        %307 = vmatpush.msra.mxu0 0.0
        %308 = vmatpush.msra.mxu0 0.0
        %309 = vmatpush.msra.mxu0 0.0
        %310 = vmatpush.msra.mxu0 0.0
        %311 = vmatpush.msra.mxu0 0.0
        %312 = vmatpush.msra.mxu0 0.0
        %v313 = vand.u32 %v273, 4294901760
        %314 = vmatpush.msra.mxu0 %v313
        %v315 = vand.u32 %v272, 4294901760
        %316 = vmatpush.msra.mxu0 %v315
        %v317 = vand.u32 %v276, 4294901760
        %v318 = vsub.f32 %v276, %v317
        %v319 = vand.u32 %v318, 4294901760
        %v320 = vsub.f32 %v318, %v319
        %v321 = vand.u32 %v320, 4294901760
        %322 = vmatmul.f32.gmra.mxu0 %v321
        %v323 = vpop.f32.mrf.mxu0
        %v324 = vadd.f32 0.0, %v323
        %v325 = vand.u32 %v279, 4294901760
        %v326 = vsub.f32 %v279, %v325
        %v327 = vand.u32 %v326, 4294901760
        %v328 = vsub.f32 %v326, %v327
        %v329 = vand.u32 %v328, 4294901760
        %330 = vmatmul.f32.gmra.mxu0 %v329
        %v331 = vpop.f32.mrf.mxu0
        %v332 = vadd.f32 0.0, %v331
        %v333 = vand.u32 %v282, 4294901760
        %v334 = vsub.f32 %v282, %v333
        %v335 = vand.u32 %v334, 4294901760
        %v336 = vsub.f32 %v334, %v335
        %v337 = vand.u32 %v336, 4294901760
        %338 = vmatmul.f32.gmra.mxu0 %v337
        %v339 = vpop.f32.mrf.mxu0
        %v340 = vadd.f32 0.0, %v339
        %v341 = vand.u32 %v285, 4294901760
        %v342 = vsub.f32 %v285, %v341
        %v343 = vand.u32 %v342, 4294901760
        %v344 = vsub.f32 %v342, %v343
        %v345 = vand.u32 %v344, 4294901760
        %346 = vmatmul.f32.gmra.mxu0 %v345
        %v347 = vpop.f32.mrf.mxu0
        %v348 = vadd.f32 0.0, %v347
        %v349 = vand.u32 %v288, 4294901760
        %v350 = vsub.f32 %v288, %v349
        %v351 = vand.u32 %v350, 4294901760
        %v352 = vsub.f32 %v350, %v351
        %v353 = vand.u32 %v352, 4294901760
        %354 = vmatmul.f32.gmra.mxu0 %v353
        %v355 = vpop.f32.mrf.mxu0
        %v356 = vadd.f32 0.0, %v355
        %v357 = vand.u32 %v291, 4294901760
        %v358 = vsub.f32 %v291, %v357
        %v359 = vand.u32 %v358, 4294901760
        %v360 = vsub.f32 %v358, %v359
        %v361 = vand.u32 %v360, 4294901760
        %362 = vmatmul.f32.gmra.mxu0 %v361
        %v363 = vpop.f32.mrf.mxu0
        %v364 = vadd.f32 0.0, %v363
        %v365 = vand.u32 %v294, 4294901760
        %v366 = vsub.f32 %v294, %v365
        %v367 = vand.u32 %v366, 4294901760
        %v368 = vsub.f32 %v366, %v367
        %v369 = vand.u32 %v368, 4294901760
        %370 = vmatmul.f32.gmra.mxu0 %v369
        %v371 = vpop.f32.mrf.mxu0
        %v372 = vadd.f32 0.0, %v371
        %v373 = vand.u32 %v297, 4294901760
        %v374 = vsub.f32 %v297, %v373
        %v375 = vand.u32 %v374, 4294901760
        %v376 = vsub.f32 %v374, %v375
        %v377 = vand.u32 %v376, 4294901760
        %378 = vmatmul.f32.gmra.mxu0 %v377
        %v379 = vpop.f32.mrf.mxu0
        %v380 = vadd.f32 0.0, %v379
        %381 = vdwg.mxu0
        %382 = vmatpush.msra.mxu0 0.0
        %383 = vmatpush.msra.mxu0 0.0
        %384 = vmatpush.msra.mxu0 0.0
        %385 = vmatpush.msra.mxu0 0.0
        %386 = vmatpush.msra.mxu0 0.0
        %387 = vmatpush.msra.mxu0 0.0
        %388 = vmatpush.msra.mxu0 0.0
        %389 = vmatpush.msra.mxu0 0.0
        %390 = vmatpush.msra.mxu0 0.0
        %391 = vmatpush.msra.mxu0 0.0
        %392 = vmatpush.msra.mxu0 0.0
        %393 = vmatpush.msra.mxu0 0.0
        %394 = vmatpush.msra.mxu0 0.0
        %395 = vmatpush.msra.mxu0 0.0
        %v396 = vand.u32 %v273, 4294901760
        %v397 = vsub.f32 %v273, %v396
        %v398 = vand.u32 %v397, 4294901760
        %v399 = vsub.f32 %v397, %v398
        %v400 = vand.u32 %v399, 4294901760
        %401 = vmatpush.msra.mxu0 %v400
        %v402 = vand.u32 %v272, 4294901760
        %v403 = vsub.f32 %v272, %v402
        %v404 = vand.u32 %v403, 4294901760
        %v405 = vsub.f32 %v403, %v404
        %v406 = vand.u32 %v405, 4294901760
        %407 = vmatpush.msra.mxu0 %v406
        %v408 = vand.u32 %v276, 4294901760
        %409 = vmatmul.f32.gmra.mxu0 %v408
        %v410 = vpop.f32.mrf.mxu0
        %v411 = vadd.f32 %v324, %v410
        %v412 = vand.u32 %v279, 4294901760
        %413 = vmatmul.f32.gmra.mxu0 %v412
        %v414 = vpop.f32.mrf.mxu0
        %v415 = vadd.f32 %v332, %v414
        %v416 = vand.u32 %v282, 4294901760
        %417 = vmatmul.f32.gmra.mxu0 %v416
        %v418 = vpop.f32.mrf.mxu0
        %v419 = vadd.f32 %v340, %v418
        %v420 = vand.u32 %v285, 4294901760
        %421 = vmatmul.f32.gmra.mxu0 %v420
        %v422 = vpop.f32.mrf.mxu0
        %v423 = vadd.f32 %v348, %v422
        %v424 = vand.u32 %v288, 4294901760
        %425 = vmatmul.f32.gmra.mxu0 %v424
        %v426 = vpop.f32.mrf.mxu0
        %v427 = vadd.f32 %v356, %v426
        %v428 = vand.u32 %v291, 4294901760
        %429 = vmatmul.f32.gmra.mxu0 %v428
        %v430 = vpop.f32.mrf.mxu0
        %v431 = vadd.f32 %v364, %v430
        %v432 = vand.u32 %v294, 4294901760
        %433 = vmatmul.f32.gmra.mxu0 %v432
        %v434 = vpop.f32.mrf.mxu0
        %v435 = vadd.f32 %v372, %v434
        %v436 = vand.u32 %v297, 4294901760
        %437 = vmatmul.f32.gmra.mxu0 %v436
        %v438 = vpop.f32.mrf.mxu0
        %v439 = vadd.f32 %v380, %v438
        %440 = vdwg.mxu0
        %441 = vmatpush.msra.mxu0 0.0
        %442 = vmatpush.msra.mxu0 0.0
        %443 = vmatpush.msra.mxu0 0.0
        %444 = vmatpush.msra.mxu0 0.0
        %445 = vmatpush.msra.mxu0 0.0
        %446 = vmatpush.msra.mxu0 0.0
        %447 = vmatpush.msra.mxu0 0.0
        %448 = vmatpush.msra.mxu0 0.0
        %449 = vmatpush.msra.mxu0 0.0
        %450 = vmatpush.msra.mxu0 0.0
        %451 = vmatpush.msra.mxu0 0.0
        %452 = vmatpush.msra.mxu0 0.0
        %453 = vmatpush.msra.mxu0 0.0
        %454 = vmatpush.msra.mxu0 0.0
        %v455 = vand.u32 %v273, 4294901760
        %v456 = vsub.f32 %v273, %v455
        %457 = vmatpush.msra.mxu0 %v456
        %v458 = vand.u32 %v272, 4294901760
        %v459 = vsub.f32 %v272, %v458
        %460 = vmatpush.msra.mxu0 %v459
        %v461 = vand.u32 %v276, 4294901760
        %v462 = vsub.f32 %v276, %v461
        %463 = vmatmul.f32.gmra.mxu0 %v462
        %v464 = vpop.f32.mrf.mxu0
        %v465 = vadd.f32 %v411, %v464
        %v466 = vand.u32 %v279, 4294901760
        %v467 = vsub.f32 %v279, %v466
        %468 = vmatmul.f32.gmra.mxu0 %v467
        %v469 = vpop.f32.mrf.mxu0
        %v470 = vadd.f32 %v415, %v469
        %v471 = vand.u32 %v282, 4294901760
        %v472 = vsub.f32 %v282, %v471
        %473 = vmatmul.f32.gmra.mxu0 %v472
        %v474 = vpop.f32.mrf.mxu0
        %v475 = vadd.f32 %v419, %v474
        %v476 = vand.u32 %v285, 4294901760
        %v477 = vsub.f32 %v285, %v476
        %478 = vmatmul.f32.gmra.mxu0 %v477
        %v479 = vpop.f32.mrf.mxu0
        %v480 = vadd.f32 %v423, %v479
        %v481 = vand.u32 %v288, 4294901760
        %v482 = vsub.f32 %v288, %v481
        %483 = vmatmul.f32.gmra.mxu0 %v482
        %v484 = vpop.f32.mrf.mxu0
        %v485 = vadd.f32 %v427, %v484
        %v486 = vand.u32 %v291, 4294901760
        %v487 = vsub.f32 %v291, %v486
        %488 = vmatmul.f32.gmra.mxu0 %v487
        %v489 = vpop.f32.mrf.mxu0
        %v490 = vadd.f32 %v431, %v489
        %v491 = vand.u32 %v294, 4294901760
        %v492 = vsub.f32 %v294, %v491
        %493 = vmatmul.f32.gmra.mxu0 %v492
        %v494 = vpop.f32.mrf.mxu0
        %v495 = vadd.f32 %v435, %v494
        %v496 = vand.u32 %v297, 4294901760
        %v497 = vsub.f32 %v297, %v496
        %498 = vmatmul.f32.gmra.mxu0 %v497
        %v499 = vpop.f32.mrf.mxu0
        %v500 = vadd.f32 %v439, %v499
        %501 = vdwg.mxu0
        %502 = vmatpush.msra.mxu0 0.0
        %503 = vmatpush.msra.mxu0 0.0
        %504 = vmatpush.msra.mxu0 0.0
        %505 = vmatpush.msra.mxu0 0.0
        %506 = vmatpush.msra.mxu0 0.0
        %507 = vmatpush.msra.mxu0 0.0
        %508 = vmatpush.msra.mxu0 0.0
        %509 = vmatpush.msra.mxu0 0.0
        %510 = vmatpush.msra.mxu0 0.0
        %511 = vmatpush.msra.mxu0 0.0
        %512 = vmatpush.msra.mxu0 0.0
        %513 = vmatpush.msra.mxu0 0.0
        %514 = vmatpush.msra.mxu0 0.0
        %515 = vmatpush.msra.mxu0 0.0
        %v516 = vand.u32 %v273, 4294901760
        %517 = vmatpush.msra.mxu0 %v516
        %v518 = vand.u32 %v272, 4294901760
        %519 = vmatpush.msra.mxu0 %v518
        %v520 = vand.u32 %v276, 4294901760
        %v521 = vsub.f32 %v276, %v520
        %v522 = vand.u32 %v521, 4294901760
        %523 = vmatmul.f32.gmra.mxu0 %v522
        %v524 = vpop.f32.mrf.mxu0
        %v525 = vadd.f32 %v465, %v524
        %v526 = vand.u32 %v279, 4294901760
        %v527 = vsub.f32 %v279, %v526
        %v528 = vand.u32 %v527, 4294901760
        %529 = vmatmul.f32.gmra.mxu0 %v528
        %v530 = vpop.f32.mrf.mxu0
        %v531 = vadd.f32 %v470, %v530
        %v532 = vand.u32 %v282, 4294901760
        %v533 = vsub.f32 %v282, %v532
        %v534 = vand.u32 %v533, 4294901760
        %535 = vmatmul.f32.gmra.mxu0 %v534
        %v536 = vpop.f32.mrf.mxu0
        %v537 = vadd.f32 %v475, %v536
        %v538 = vand.u32 %v285, 4294901760
        %v539 = vsub.f32 %v285, %v538
        %v540 = vand.u32 %v539, 4294901760
        %541 = vmatmul.f32.gmra.mxu0 %v540
        %v542 = vpop.f32.mrf.mxu0
        %v543 = vadd.f32 %v480, %v542
        %v544 = vand.u32 %v288, 4294901760
        %v545 = vsub.f32 %v288, %v544
        %v546 = vand.u32 %v545, 4294901760
        %547 = vmatmul.f32.gmra.mxu0 %v546
        %v548 = vpop.f32.mrf.mxu0
        %v549 = vadd.f32 %v485, %v548
        %v550 = vand.u32 %v291, 4294901760
        %v551 = vsub.f32 %v291, %v550
        %v552 = vand.u32 %v551, 4294901760
        %553 = vmatmul.f32.gmra.mxu0 %v552
        %v554 = vpop.f32.mrf.mxu0
        %v555 = vadd.f32 %v490, %v554
        %v556 = vand.u32 %v294, 4294901760
        %v557 = vsub.f32 %v294, %v556
        %v558 = vand.u32 %v557, 4294901760
        %559 = vmatmul.f32.gmra.mxu0 %v558
        %v560 = vpop.f32.mrf.mxu0
        %v561 = vadd.f32 %v495, %v560
        %v562 = vand.u32 %v297, 4294901760
        %v563 = vsub.f32 %v297, %v562
        %v564 = vand.u32 %v563, 4294901760
        %565 = vmatmul.f32.gmra.mxu0 %v564
        %v566 = vpop.f32.mrf.mxu0
        %v567 = vadd.f32 %v500, %v566
        %568 = vdwg.mxu0
        %569 = vmatpush.msra.mxu0 0.0
        %570 = vmatpush.msra.mxu0 0.0
        %571 = vmatpush.msra.mxu0 0.0
        %572 = vmatpush.msra.mxu0 0.0
        %573 = vmatpush.msra.mxu0 0.0
        %574 = vmatpush.msra.mxu0 0.0
        %575 = vmatpush.msra.mxu0 0.0
        %576 = vmatpush.msra.mxu0 0.0
        %577 = vmatpush.msra.mxu0 0.0
        %578 = vmatpush.msra.mxu0 0.0
        %579 = vmatpush.msra.mxu0 0.0
        %580 = vmatpush.msra.mxu0 0.0
        %581 = vmatpush.msra.mxu0 0.0
        %582 = vmatpush.msra.mxu0 0.0
        %v583 = vand.u32 %v273, 4294901760
        %v584 = vsub.f32 %v273, %v583
        %v585 = vand.u32 %v584, 4294901760
        %586 = vmatpush.msra.mxu0 %v585
        %v587 = vand.u32 %v272, 4294901760
        %v588 = vsub.f32 %v272, %v587
        %v589 = vand.u32 %v588, 4294901760
        %590 = vmatpush.msra.mxu0 %v589
        %v591 = vand.u32 %v276, 4294901760
        %592 = vmatmul.f32.gmra.mxu0 %v591
        %v593 = vpop.f32.mrf.mxu0
        %v594 = vadd.f32 %v525, %v593
        %v595 = vand.u32 %v279, 4294901760
        %596 = vmatmul.f32.gmra.mxu0 %v595
        %v597 = vpop.f32.mrf.mxu0
        %v598 = vadd.f32 %v531, %v597
        %v599 = vand.u32 %v282, 4294901760
        %600 = vmatmul.f32.gmra.mxu0 %v599
        %v601 = vpop.f32.mrf.mxu0
        %v602 = vadd.f32 %v537, %v601
        %v603 = vand.u32 %v285, 4294901760
        %604 = vmatmul.f32.gmra.mxu0 %v603
        %v605 = vpop.f32.mrf.mxu0
        %v606 = vadd.f32 %v543, %v605
        %v607 = vand.u32 %v288, 4294901760
        %608 = vmatmul.f32.gmra.mxu0 %v607
        %v609 = vpop.f32.mrf.mxu0
        %v610 = vadd.f32 %v549, %v609
        %v611 = vand.u32 %v291, 4294901760
        %612 = vmatmul.f32.gmra.mxu0 %v611
        %v613 = vpop.f32.mrf.mxu0
        %v614 = vadd.f32 %v555, %v613
        %v615 = vand.u32 %v294, 4294901760
        %616 = vmatmul.f32.gmra.mxu0 %v615
        %v617 = vpop.f32.mrf.mxu0
        %v618 = vadd.f32 %v561, %v617
        %v619 = vand.u32 %v297, 4294901760
        %620 = vmatmul.f32.gmra.mxu0 %v619
        %v621 = vpop.f32.mrf.mxu0
        %v622 = vadd.f32 %v567, %v621
        %623 = vdwg.mxu0
        %624 = vmatpush.msra.mxu0 0.0
        %625 = vmatpush.msra.mxu0 0.0
        %626 = vmatpush.msra.mxu0 0.0
        %627 = vmatpush.msra.mxu0 0.0
        %628 = vmatpush.msra.mxu0 0.0
        %629 = vmatpush.msra.mxu0 0.0
        %630 = vmatpush.msra.mxu0 0.0
        %631 = vmatpush.msra.mxu0 0.0
        %632 = vmatpush.msra.mxu0 0.0
        %633 = vmatpush.msra.mxu0 0.0
        %634 = vmatpush.msra.mxu0 0.0
        %635 = vmatpush.msra.mxu0 0.0
        %636 = vmatpush.msra.mxu0 0.0
        %637 = vmatpush.msra.mxu0 0.0
        %v638 = vand.u32 %v273, 4294901760
        %639 = vmatpush.msra.mxu0 %v638
        %v640 = vand.u32 %v272, 4294901760
        %641 = vmatpush.msra.mxu0 %v640
        %v642 = vand.u32 %v276, 4294901760
        %643 = vmatmul.f32.gmra.mxu0 %v642
        %v644 = vpop.f32.mrf.mxu0
        %v645 = vadd.f32 %v594, %v644
        %v646 = vand.u32 %v279, 4294901760
        %647 = vmatmul.f32.gmra.mxu0 %v646
        %v648 = vpop.f32.mrf.mxu0
        %v649 = vadd.f32 %v598, %v648
        %v650 = vand.u32 %v282, 4294901760
        %651 = vmatmul.f32.gmra.mxu0 %v650
        %v652 = vpop.f32.mrf.mxu0
        %v653 = vadd.f32 %v602, %v652
        %v654 = vand.u32 %v285, 4294901760
        %655 = vmatmul.f32.gmra.mxu0 %v654
        %v656 = vpop.f32.mrf.mxu0
        %v657 = vadd.f32 %v606, %v656
        %v658 = vand.u32 %v288, 4294901760
        %659 = vmatmul.f32.gmra.mxu0 %v658
        %v660 = vpop.f32.mrf.mxu0
        %v661 = vadd.f32 %v610, %v660
        %v662 = vand.u32 %v291, 4294901760
        %663 = vmatmul.f32.gmra.mxu0 %v662
        %v664 = vpop.f32.mrf.mxu0
        %v665 = vadd.f32 %v614, %v664
        %v666 = vand.u32 %v294, 4294901760
        %667 = vmatmul.f32.gmra.mxu0 %v666
        %v668 = vpop.f32.mrf.mxu0
        %v669 = vadd.f32 %v618, %v668
        %v670 = vand.u32 %v297, 4294901760
        %671 = vmatmul.f32.gmra.mxu0 %v670
        %v672 = vpop.f32.mrf.mxu0
        %v673 = vadd.f32 %v622, %v672
        %674 = vdwg.mxu0
        %s675 = sld [smem:[#allocation8]]
        %v676 = vstv %s675
        %v677 = vmul.f32 %v676, %v645
        %v678 = vmul.f32 %v676, %v649
        %s679 = sld [smem:[#allocation8 + $0x1]]
        %v680 = vstv %s679
        %v681 = vmul.f32 %v680, %v653
        %v682 = vmul.f32 %v680, %v657
        %v683 = vadd.f32 %v677, %v681
        %v684 = vadd.f32 %v678, %v682
        %s685 = sld [smem:[#allocation8 + $0x2]]
        %v686 = vstv %s685
        %v687 = vmul.f32 %v686, %v661
        %v688 = vmul.f32 %v686, %v665
        %v689 = vadd.f32 %v683, %v687
        %v690 = vadd.f32 %v684, %v688
        %s691 = sld [smem:[#allocation8 + $0x3]]
        %v692 = vstv %s691
        %v693 = vmul.f32 %v692, %v669
        %v694 = vmul.f32 %v692, %v673
        %v695 = vadd.f32 %v689, %v693
        %v696 = vadd.f32 %v690, %v694
        %s697 = sld [smem:[#allocation9]]
        %v698 = vstv %s697
        %v699 = vadd.f32 %v695, %v698
        %v700 = vadd.f32 %v696, %v698
        %vm701 = vcmask 261120
        %702 = vst.msk [vmem:[%s263] sm:$0xff] %vm701, %v699
        %703 = vst.msk [vmem:[%s263 + $0x8] sm:$0xff] %vm701, %v700
        %706 = vrot.lane.b32.xlu0 %v699, 32
        %v707 = vpop.permute.xlu0 %706
        %708 = vrot.lane.b32.xlu0 %v700, 32
        %v709 = vpop.permute.xlu0 %708
        %vm712 = vcmask 523520
        %713 = vst.msk [vmem:[%s263] sm:$0xff] %vm712, %v707
        %714 = vst.msk [vmem:[%s263 + $0x8] sm:$0xff] %vm712, %v709
        %s715 = sld [smem:[#allocation8 + $0x80]]
        %v716 = vstv %s715
        %v717 = vmul.f32 %v716, %v645
        %v718 = vmul.f32 %v716, %v649
        %s719 = sld [smem:[#allocation8 + $0x81]]
        %v720 = vstv %s719
        %v721 = vmul.f32 %v720, %v653
        %v722 = vmul.f32 %v720, %v657
        %v723 = vadd.f32 %v717, %v721
        %v724 = vadd.f32 %v718, %v722
        %s725 = sld [smem:[#allocation8 + $0x82]]
        %v726 = vstv %s725
        %v727 = vmul.f32 %v726, %v661
        %v728 = vmul.f32 %v726, %v665
        %v729 = vadd.f32 %v723, %v727
        %v730 = vadd.f32 %v724, %v728
        %s731 = sld [smem:[#allocation8 + $0x83]]
        %v732 = vstv %s731
        %v733 = vmul.f32 %v732, %v669
        %v734 = vmul.f32 %v732, %v673
        %v735 = vadd.f32 %v729, %v733
        %v736 = vadd.f32 %v730, %v734
        %s737 = sld [smem:[#allocation9 + $0x1]]
        %v738 = vstv %s737
        %v739 = vadd.f32 %v735, %v738
        %v740 = vadd.f32 %v736, %v738
        %s741 = scalar_lea.vmem %s263, 16
        %742 = vst.msk [vmem:[%s741] sm:$0xff] %vm701, %v739
        %743 = vst.msk [vmem:[%s741 + $0x8] sm:$0xff] %vm701, %v740
        %746 = vrot.lane.b32.xlu0 %v739, 32
        %v747 = vpop.permute.xlu0 %746
        %748 = vrot.lane.b32.xlu0 %v740, 32
        %v749 = vpop.permute.xlu0 %748
        %752 = vst.msk [vmem:[%s741] sm:$0xff] %vm712, %v747
        %753 = vst.msk [vmem:[%s741 + $0x8] sm:$0xff] %vm712, %v749
        %s754 = sld [smem:[#allocation8 + $0x100]]
        %v755 = vstv %s754
        %v756 = vmul.f32 %v755, %v645
        %v757 = vmul.f32 %v755, %v649
        %s758 = sld [smem:[#allocation8 + $0x101]]
        %v759 = vstv %s758
        %v760 = vmul.f32 %v759, %v653
        %v761 = vmul.f32 %v759, %v657
        %v762 = vadd.f32 %v756, %v760
        %v763 = vadd.f32 %v757, %v761
        %s764 = sld [smem:[#allocation8 + $0x102]]
        %v765 = vstv %s764
        %v766 = vmul.f32 %v765, %v661
        %v767 = vmul.f32 %v765, %v665
        %v768 = vadd.f32 %v762, %v766
        %v769 = vadd.f32 %v763, %v767
        %s770 = sld [smem:[#allocation8 + $0x103]]
        %v771 = vstv %s770
        %v772 = vmul.f32 %v771, %v669
        %v773 = vmul.f32 %v771, %v673
        %v774 = vadd.f32 %v768, %v772
        %v775 = vadd.f32 %v769, %v773
        %s776 = sld [smem:[#allocation9 + $0x2]]
        %v777 = vstv %s776
        %v778 = vadd.f32 %v774, %v777
        %v779 = vadd.f32 %v775, %v777
        %s780 = scalar_lea.vmem %s263, 32
        %781 = vst.msk [vmem:[%s780] sm:$0xff] %vm701, %v778
        %782 = vst.msk [vmem:[%s780 + $0x8] sm:$0xff] %vm701, %v779
        %785 = vrot.lane.b32.xlu0 %v778, 32
        %v786 = vpop.permute.xlu0 %785
        %787 = vrot.lane.b32.xlu0 %v779, 32
        %v788 = vpop.permute.xlu0 %787
        %791 = vst.msk [vmem:[%s780] sm:$0xff] %vm712, %v786
        %792 = vst.msk [vmem:[%s780 + $0x8] sm:$0xff] %vm712, %v788
        %s793 = sld [smem:[#allocation8 + $0x180]]
        %v794 = vstv %s793
        %v795 = vmul.f32 %v794, %v645
        %v796 = vmul.f32 %v794, %v649
        %s797 = sld [smem:[#allocation8 + $0x181]]
        %v798 = vstv %s797
        %v799 = vmul.f32 %v798, %v653
        %v800 = vmul.f32 %v798, %v657
        %v801 = vadd.f32 %v795, %v799
        %v802 = vadd.f32 %v796, %v800
        %s803 = sld [smem:[#allocation8 + $0x182]]
        %v804 = vstv %s803
        %v805 = vmul.f32 %v804, %v661
        %v806 = vmul.f32 %v804, %v665
        %v807 = vadd.f32 %v801, %v805
        %v808 = vadd.f32 %v802, %v806
        %s809 = sld [smem:[#allocation8 + $0x183]]
        %v810 = vstv %s809
        %v811 = vmul.f32 %v810, %v669
        %v812 = vmul.f32 %v810, %v673
        %v813 = vadd.f32 %v807, %v811
        %v814 = vadd.f32 %v808, %v812
        %s815 = sld [smem:[#allocation9 + $0x3]]
        %v816 = vstv %s815
        %v817 = vadd.f32 %v813, %v816
        %v818 = vadd.f32 %v814, %v816
        %s819 = scalar_lea.vmem %s263, 48
        %820 = vst.msk [vmem:[%s819] sm:$0xff] %vm701, %v817
        %821 = vst.msk [vmem:[%s819 + $0x8] sm:$0xff] %vm701, %v818
        %824 = vrot.lane.b32.xlu0 %v817, 32
        %v825 = vpop.permute.xlu0 %824
        %826 = vrot.lane.b32.xlu0 %v818, 32
        %v827 = vpop.permute.xlu0 %826
        %830 = vst.msk [vmem:[%s819] sm:$0xff] %vm712, %v825
        %831 = vst.msk [vmem:[%s819 + $0x8] sm:$0xff] %vm712, %v827
        %p832 = scmp.lt.s32.totalorder %s21, 1
        %s833 = scalar_select %p832, %s21, 1
        %s834 = smul.addr %s833, 8
        %s835 = smul.addr %s834, 8
        %s836 = scalar_lea.vmem %s4, %s835
        // Predicated region
        $region53: #{unet_dsv3_forward.1} parent=35 // pred_check
          %p837 = pneg %p128
        $region54: #{unet_dsv3_forward.1} parent=35 // pred_check_branch
          %839 = sbr.rel (%p837) target = $region56
        $region55: #{unet_dsv3_forward.1} parent=35 // pred_region
          _
        $region56: #{unet_dsv3_forward.1} parent=35 // pred_fallthru
          _
      $region36: #{unet_dsv3_forward.1} parent=5 // pred_fallthru
        _
      %p840 = scmp.le.s32.totalorder 2, %s16
      // Predicated region
      $region57: #{unet_dsv3_forward.1} parent=5 // pred_check
        %p841 = pneg %p840
      $region58: #{unet_dsv3_forward.1} parent=5 // pred_check_branch
        %843 = sbr.rel (%p841) target = $region60
      $region59: #{unet_dsv3_forward.1} parent=5 // pred_region
        %s844 = ssub.s32 %s16, 2
        // Predicated region
        $region61: #{unet_dsv3_forward.1} parent=59 // pred_check
          %p845 = pneg %p134
        $region62: #{unet_dsv3_forward.1} parent=59 // pred_check_branch
          %847 = sbr.rel (%p845) target = $region64
        $region63: #{unet_dsv3_forward.1} parent=59 // pred_region
          %p848 = scmp.lt.s32.totalorder %s22, 1
          %s849 = scalar_select %p848, %s22, 1
          %s850 = smul.addr %s849, 8
          %s851 = smul.addr %s850, 8
          %s852 = scalar_lea.vmem %s4, %s851
        $region64: #{unet_dsv3_forward.1} parent=59 // pred_fallthru
          _
      $region60: #{unet_dsv3_forward.1} parent=5 // pred_fallthru
        _
    $region6: #{unet_dsv3_forward.1} parent=1 // loop_footer
      %s20 = sadd.s32 1, %s16
    $region7: #{unet_dsv3_forward.1} parent=1 // loop_footer_branch
      %15 = sbr.rel target = $region3
    $region8: #{unet_dsv3_forward.1} parent=1 // loop_exit
      _
    %853 = vsyncpa [#allocation3], 1
    %s854 = scalar_lea.sflag [#allocation3], 1
    %855 = vsyncpa %s854, 1
    %856 = vsyncpa [#allocation7], 1
    %857 = vsyncpa [#allocation4], 1
    %s858 = scalar_lea.sflag [#allocation4], 1
    %859 = vsyncpa %s858, 1
    %860 = vsyncpa [#allocation5], 1
    %s861 = scalar_lea.sflag [#allocation5], 1
    %862 = vsyncpa %s861, 1

</llo_original>
